<compile_context>
chip_gen: v7x
topology: tpu7x:2x2x1
jax: 0.10.0
libtpu: 0.0.40
codegen_flags: <defaults>
</compile_context>

<pallas_src>
import jax
import jax.numpy as jnp
from jax.experimental import pallas as pl
from jax.experimental.pallas import tpu as pltpu


def _scaler_transform_kernel(x_ref, inv_scale_ref, shift_ref, o_ref):
    # Fused per-element standardize: y = x * (1/scale) - mean*(1/scale).
    x = x_ref[...].astype(jnp.float32)          # in-kernel upcast of native dtype
    o_ref[...] = (x * inv_scale_ref[...] - shift_ref[...]).astype(o_ref.dtype)


def _cdiv(a, b):
    return -(-a // b)


def _round_up(v, m):
    return _cdiv(v, m) * m


def _sublane_align(itemsize):
    # Rows per packed sublane group: f32 -> 8, bf16/f16 -> 16, int8/fp8 -> 32.
    return 8 * max(1, 4 // int(itemsize))


def scaler_transform(x, mean, scale, *, out_dtype=jnp.float32,
                     vmem_budget_bytes=24 * 1024 * 1024, max_block_rows=1024):
    """Pallas equivalent of ScalerWrapper.forward (StandardScaler.transform)."""
    if x.ndim == 1:
        x = x.reshape(1, -1)
    n, d = x.shape

    # ---- constants: computed once as tiny (1, d) ops in the wrapper -------
    scale_f = scale.reshape(1, d).astype(jnp.float32)
    # sklearn replaces zero-variance scale_ with 1.0; mirror that guard so a
    # raw checkpoint with zeros can't produce inf/NaN.
    scale_f = jnp.where(scale_f == 0.0, jnp.float32(1.0), scale_f)
    inv_scale_f = 1.0 / scale_f                 # exact division, done once
    shift_f = mean.reshape(1, d).astype(jnp.float32) * inv_scale_f

    x_bytes = jnp.dtype(x.dtype).itemsize
    o_bytes = jnp.dtype(out_dtype).itemsize
    row_align = max(_sublane_align(x_bytes), _sublane_align(o_bytes))

    # ---- feature tile: full extent unless a single row-group tile would ----
    # ---- exceed the VMEM budget; then tile D in lane-dense 128-multiples. --
    const_bytes_per_lane = 2 * 2 * 4            # inv_scale + shift, double-buffered f32
    per_lane_bytes = 2 * (x_bytes + o_bytes) * row_align + const_bytes_per_lane
    max_td = max(128, vmem_budget_bytes // per_lane_bytes)
    if d <= max_td:
        td = d                                  # full extent: always a legal block dim
    else:
        td = max(128, min(max_td, 8192) // 128 * 128)   # ragged edge is masked
    col_steps = _cdiv(d, td)

    # ---- row tile: fill the VMEM budget, aligned to the dtype packing ------
    const_bytes = const_bytes_per_lane * td
    per_row_bytes = 2 * (x_bytes + o_bytes) * td        # 2x = double buffering
    if n <= row_align:
        tn = n                                  # full extent: always legal
    else:
        avail = max(per_row_bytes, vmem_budget_bytes - const_bytes)
        tn = max(row_align, (avail // per_row_bytes) // row_align * row_align)
        tn = min(tn, _round_up(max_block_rows, row_align))
        # v7x megacore: keep >= 2 row steps so both TensorCores get work.
        tn = min(tn, max(row_align, _round_up(_cdiv(n, 2), row_align)))
        tn = min(tn, _round_up(n, row_align))
    row_steps = _cdiv(n, tn)

    # ---- VMEM limit derived from the actual double-buffered footprint ------
    tile_bytes = 2 * tn * td * (x_bytes + o_bytes) + const_bytes
    vmem_limit = int(tile_bytes * 1.25) + (1 << 20)
    vmem_limit = max(2 * 1024 * 1024, min(vmem_limit, 48 * 1024 * 1024))

    cost = pl.CostEstimate(
        flops=2 * n * d,
        transcendentals=0,
        bytes_accessed=n * d * (x_bytes + o_bytes) + 2 * d * 4,
    )

    return pl.pallas_call(
        _scaler_transform_kernel,
        out_shape=jax.ShapeDtypeStruct((n, d), out_dtype),
        grid_spec=pltpu.PrefetchScalarGridSpec(
            num_scalar_prefetch=0,
            grid=(row_steps, col_steps),
            in_specs=[
                pl.BlockSpec((tn, td), lambda i, j: (i, j)),   # x tile (native dtype)
                pl.BlockSpec((1, td), lambda i, j: (0, j)),    # 1/scale (broadcast)
                pl.BlockSpec((1, td), lambda i, j: (0, j)),    # mean/scale (broadcast)
            ],
            out_specs=pl.BlockSpec((tn, td), lambda i, j: (i, j)),
        ),
        compiler_params=pltpu.CompilerParams(
            dimension_semantics=("parallel", "parallel"),
            vmem_limit_bytes=vmem_limit,
        ),
        cost_estimate=cost,
    )(x, inv_scale_f, shift_f)

# TODO(synk): reverse() (inverse_transform) and the host-side .cpu()/.numpy()
# round-trip of the original module are not translated; only forward() is.


if __name__ == "__main__":
    key = jax.random.PRNGKey(0)
    kx, km, ks = jax.random.split(key, 3)

    N, D = 8, 32  # small shapes: batch of 8 feature vectors, 32 features
    x = jax.random.normal(kx, (N, D), dtype=jnp.float32) * 3.0 + 1.5

    # Deterministic "fitted" StandardScaler parameters (synthetic, not loaded).
    mean = jax.random.normal(km, (D,), dtype=jnp.float32)
    scale = jnp.abs(jax.random.normal(ks, (D,), dtype=jnp.float32)) + 0.5

    y = jax.block_until_ready(scaler_transform(x, mean, scale))

    # Reference check in plain JAX (StandardScaler.transform semantics).
    y_ref = (x - mean[None, :]) / scale[None, :]
    assert y.shape == (N, D) and y.dtype == jnp.float32
    assert jnp.allclose(y, y_ref, atol=1e-5, rtol=1e-5)

    # 1-D input path (reshaped to (1, -1) like the module).
    x1d = x[0]
    y1d = jax.block_until_ready(scaler_transform(x1d, mean, scale))
    assert y1d.shape == (1, D)
    assert jnp.allclose(y1d[0], y_ref[0], atol=1e-5, rtol=1e-5)

    # Ragged rows AND non-128 feature dim (exercises masked edge tiles; no pads).
    Nr, Dr = 13, 100
    xr = jax.random.normal(kx, (Nr, Dr), dtype=jnp.float32) * 2.0 - 0.7
    mr = jax.random.normal(km, (Dr,), dtype=jnp.float32)
    sr = jnp.abs(jax.random.normal(ks, (Dr,), dtype=jnp.float32)) + 0.5
    yr = jax.block_until_ready(scaler_transform(xr, mr, sr))
    yr_ref = (xr - mr[None, :]) / sr[None, :]
    assert yr.shape == (Nr, Dr)
    assert jnp.allclose(yr, yr_ref, atol=1e-5, rtol=1e-5)

    # bf16 input with in-kernel upcast (native-dtype path, packing-aligned tile).
    xb = x.astype(jnp.bfloat16)
    yb = jax.block_until_ready(scaler_transform(xb, mean, scale))
    yb_ref = (xb.astype(jnp.float32) - mean[None, :]) / scale[None, :]
    assert yb.dtype == jnp.float32
    assert jnp.allclose(yb, yb_ref, atol=1e-2, rtol=1e-2)

    print("KERNEL_OK")
</pallas_src>

<mosaic_0001>
module attributes {stable_mosaic.version = 11 : i64} {
  func.func @_scaler_transform_kernel(%arg0: i32, %arg1: i32, %arg2: memref<8x32xf32, #tpu.memory_space<vmem>>, %arg3: memref<1x32xf32, #tpu.memory_space<vmem>>, %arg4: memref<1x32xf32, #tpu.memory_space<vmem>>, %arg5: memref<8x32xf32, #tpu.memory_space<vmem>>) attributes {dimension_semantics = [#tpu.dimension_semantics<parallel>, #tpu.dimension_semantics<parallel>], iteration_bounds = array<i64: 1, 1>, scalar_prefetch = 0 : i64, scratch_operands = 0 : i64, tpu.core_type = #tpu.core_type<tc>, window_params = [{transform_indices = @transform_0, window_bounds = array<i64: 8, 32>}, {transform_indices = @transform_1, window_bounds = array<i64: 1, 32>}, {transform_indices = @transform_2, window_bounds = array<i64: 1, 32>}, {transform_indices = @transform_3, window_bounds = array<i64: 8, 32>}]} {
    %c0 = arith.constant 0 : index
    %c0_0 = arith.constant 0 : index
    %0 = vector.load %arg2[%c0, %c0_0] : memref<8x32xf32, #tpu.memory_space<vmem>>, vector<8x32xf32>
    %c0_1 = arith.constant 0 : index
    %c0_2 = arith.constant 0 : index
    %1 = vector.load %arg3[%c0_1, %c0_2] : memref<1x32xf32, #tpu.memory_space<vmem>>, vector<1x32xf32>
    %2 = vector.broadcast %1 : vector<1x32xf32> to vector<8x32xf32>
    %3 = arith.mulf %0, %2 : vector<8x32xf32>
    %c0_3 = arith.constant 0 : index
    %c0_4 = arith.constant 0 : index
    %4 = vector.load %arg4[%c0_3, %c0_4] : memref<1x32xf32, #tpu.memory_space<vmem>>, vector<1x32xf32>
    %5 = vector.broadcast %4 : vector<1x32xf32> to vector<8x32xf32>
    %6 = arith.subf %3, %5 : vector<8x32xf32>
    %c0_5 = arith.constant 0 : index
    %c0_6 = arith.constant 0 : index
    %7 = vector.load %arg5[%c0_5, %c0_6] : memref<8x32xf32, #tpu.memory_space<vmem>>, vector<8x32xf32>
    tpu.vector_store %arg5[%c0_5, %c0_6], %6 {strides = array<i32>} : memref<8x32xf32, #tpu.memory_space<vmem>>, vector<8x32xf32>,
    return
  }
  func.func @transform_0(%arg0: i32, %arg1: i32) -> (i32, i32) {
    %c0_i32 = arith.constant 0 : i32
    return %arg0, %arg1 : i32, i32
  }
  func.func @transform_1(%arg0: i32, %arg1: i32) -> (i32, i32) {
    %c0_i32 = arith.constant 0 : i32
    %c0_i32_0 = arith.constant 0 : i32
    return %c0_i32, %arg1 : i32, i32
  }
  func.func @transform_2(%arg0: i32, %arg1: i32) -> (i32, i32) {
    %c0_i32 = arith.constant 0 : i32
    %c0_i32_0 = arith.constant 0 : i32
    return %c0_i32, %arg1 : i32, i32
  }
  func.func @transform_3(%arg0: i32, %arg1: i32) -> (i32, i32) {
    %c0_i32 = arith.constant 0 : i32
    return %arg0, %arg1 : i32, i32
  }
}

</mosaic_0001>

<llo_original>
// kernel: tpu_custom_call.1
$region0: #{tpu_custom_call.1}
  #allocation0 [shape = 'u32[]', space=smem, size = 0x4, offset = 0x4, fixed_abs, tag = 'smem constant byte address 0x4 - core index']
  #allocation1 [shape = 'u32[144,128]{1,0:T(1,128)}', space=vmem, size = 0x12000, scoped, tag = 'internal scratch']
  %s0 = inlined_call_operand.hbm [shape: f32[8,32], index: 0, kind: input, shape index: {}]
  %s1 = inlined_call_operand.vmem [shape: f32[1,32], index: 1, kind: input, shape index: {}]
  %s2 = inlined_call_operand.vmem [shape: f32[1,32], index: 2, kind: input, shape index: {}]
  %s3 = inlined_call_operand.hbm [shape: f32[8,32], index: 3, kind: output, shape index: {}]
  %s4 = sld [smem:[#allocation0]]
  $region26: #{tpu_custom_call.1} parent=0
    _
  %s6 = ssub.s32 1, %s4
  %s7 = scalar_select 0, %s6, %s4
  $region1: #{tpu_custom_call.1} parent=0
    #allocation2 [shape = 'u8[4096]{0}', space=vmem, size = 0x1000, scoped, tag = 'input window, operand 0, single buffered']
    #allocation3 [shape = 's32[1]{0}', space=sflag, size = 0x4, scoped, tag = 'scoped memory for tpu_custom_call.1']
    #allocation4 [shape = 's32[1]{0}', space=sflag, size = 0x4, scoped, tag = 'scoped memory for tpu_custom_call.1']
    #allocation5 [shape = 'u8[4096]{0}', space=vmem, size = 0x1000, scoped, tag = 'output window, operand 0, single buffered']
    %8 = vsyncpa [#allocation3], 0
    %9 = vsyncpa [#allocation4], 0
    // Predicated region
    $region2: #{tpu_custom_call.1} parent=1 // pred_check
      _
    $region3: #{tpu_custom_call.1} parent=1 // pred_check_branch
      %11 = sbr.rel (0) target = $region5
    $region4: #{tpu_custom_call.1} parent=1 // pred_region
      %s13 = ssub.s32 128, 128
      %14 = vsyncadd [#allocation3], %s13
      %s16 = sshll.u32 [#allocation2], 4
      %s17 = int_to_ptr.vmem [resolvable:$true] %s16
      %19 = dma.hbm_to_vmem [thread:$0]  %s0, 128, %s17, [#allocation3]
    $region5: #{tpu_custom_call.1} parent=1 // pred_fallthru
      _
    // Predicated region
    $region6: #{tpu_custom_call.1} parent=1 // pred_check
      _
    $region7: #{tpu_custom_call.1} parent=1 // pred_check_branch
      %21 = sbr.rel (0) target = $region9
    $region8: #{tpu_custom_call.1} parent=1 // pred_region
      _
    $region9: #{tpu_custom_call.1} parent=1 // pred_fallthru
      _
    // Predicated region
    $region10: #{tpu_custom_call.1} parent=1 // pred_check
      _
    $region11: #{tpu_custom_call.1} parent=1 // pred_check_branch
      %23 = sbr.rel (0) target = $region13
    $region12: #{tpu_custom_call.1} parent=1 // pred_region
      _
    $region13: #{tpu_custom_call.1} parent=1 // pred_fallthru
      _
    // Predicated region
    $region14: #{tpu_custom_call.1} parent=1 // pred_check
      _
    $region15: #{tpu_custom_call.1} parent=1 // pred_check_branch
      %25 = sbr.rel (0) target = $region17
    $region16: #{tpu_custom_call.1} parent=1 // pred_region
      %26 = dma.done [#allocation3], 128
    $region17: #{tpu_custom_call.1} parent=1 // pred_fallthru
      _
    %v27 = vld [vmem:[#allocation2] sm:$0xff]
    %v28 = vld [vmem:[%s1] sm:$0x1]
    %v30 = vlaneseq
    %v31 = vshrl.u32 %v30, 7
    %v32 = vsub.s32 0, %v31
    %v33 = vrot.slane %v28, %v32
    %v35 = vmul.f32 %v27, %v33
    %v36 = vld [vmem:[%s2] sm:$0x1]
    %v38 = vlaneseq
    %v39 = vshrl.u32 %v38, 7
    %v40 = vsub.s32 0, %v39
    %v41 = vrot.slane %v36, %v40
    %v43 = vsub.f32 %v35, %v41
    %vm44 = vcmask 261120
    %45 = vst.msk [vmem:[#allocation5] sm:$0xff] %vm44, %v43
    // Predicated region
    $region18: #{tpu_custom_call.1} parent=1 // pred_check
      _
    $region19: #{tpu_custom_call.1} parent=1 // pred_check_branch
      %47 = sbr.rel (0) target = $region21
    $region20: #{tpu_custom_call.1} parent=1 // pred_region
      %s49 = ssub.s32 128, 128
      %50 = vsyncadd [#allocation4], %s49
      %s52 = sshll.u32 [#allocation5], 4
      %s53 = int_to_ptr.vmem [resolvable:$true] %s52
      %55 = dma.vmem_to_hbm [thread:$0]  %s53, 128, %s3, [#allocation4]
    $region21: #{tpu_custom_call.1} parent=1 // pred_fallthru
      _
    // Predicated region
    $region22: #{tpu_custom_call.1} parent=1 // pred_check
      _
    $region23: #{tpu_custom_call.1} parent=1 // pred_check_branch
      %57 = sbr.rel (0) target = $region25
    $region24: #{tpu_custom_call.1} parent=1 // pred_region
      %58 = dma.done [#allocation4], 128
    $region25: #{tpu_custom_call.1} parent=1 // pred_fallthru
      _
    %59 = vsyncpa [#allocation3], 1
    %60 = vsyncpa [#allocation4], 1

</llo_original>
